<compile_context>
chip_gen: v6e
topology: v6e:2x2x1
jax: 0.10.0
libtpu: 0.0.40
codegen_flags: <defaults>
</compile_context>

<pallas_src>
import jax
import jax.numpy as jnp
from jax.experimental import pallas as pl
from jax.experimental.pallas import tpu as pltpu

LN_EPS = 1e-5

_MIB = 1024 * 1024
_ROWS_VMEM_BUDGET = 30 * _MIB      # row-proportional VMEM (I/O dbl-buffers + temps)
_VMEM_LIMIT_CAP = 48 * _MIB        # <= v7x's 64 MiB physical per TC, fine on v5e/v6e
_BLOCK_BYTES_TARGET = 4 * _MIB     # mem-bound roofline plateaus by ~1-4 MiB blocks
_TARGET_MIN_GRID_STEPS = 8         # keep both v7x TensorCores fed


def _cdiv(a, b):
    return -(-a // b)


def _round_up(n, m):
    return _cdiv(n, m) * m


# ----------------------------- Pallas kernel ------------------------------- #

def _adaln_kernel(x_ref, batch_ref, table_ref, o_ref):
    """Fused per-tile: gather([scale|shift] by batch) + LayerNorm + addcmul."""
    x = x_ref[...].astype(jnp.float32)                        # (rt, F)
    rt, F = x.shape
    B = table_ref.shape[0]

    # Per-row gather from the VMEM-resident (B, 2F) table via ONE one-hot
    # matmul (guaranteed lowering on all TPU generations; the MXU is idle in
    # this mem-bound kernel so its cost is hidden).  HIGHEST precision keeps
    # the selected f32 table values exact (one-hot entries are exactly 0/1).
    idx = batch_ref[...]                                      # (rt, 1) int32
    onehot = (jax.lax.broadcasted_iota(jnp.int32, (rt, B), 1) == idx
              ).astype(jnp.float32)                           # (rt, B)
    ss = jnp.dot(onehot, table_ref[...],
                 preferred_element_type=jnp.float32,
                 precision=jax.lax.Precision.HIGHEST)         # (rt, 2F)
    scale = ss[:, :F]        # `1 +` already folded into the table bias
    shift = ss[:, F:]        # free static slice when F % 128 == 0

    # LayerNorm, no affine: biased variance, eps inside rsqrt (torch semantics).
    mean = jnp.mean(x, axis=-1, keepdims=True)
    centered = x - mean
    var = jnp.mean(centered * centered, axis=-1, keepdims=True)
    xn = centered * jax.lax.rsqrt(var + LN_EPS)

    o_ref[...] = (shift + xn * scale).astype(o_ref.dtype)


# ------------------------------ Python wrapper ------------------------------ #

def prepare_adaln_params(proj_weight, proj_bias):
    """One-time prep (outside the hot path).

    PyTorch nn.Linear layout (2F, A)/(2F,)  ->  pre-transposed (A, 2F) weight
    plus a bias with the `1 + scale` folded into its scale half.
    """
    F2, _ = proj_weight.shape
    F = F2 // 2
    w_t = jnp.asarray(proj_weight, jnp.float32).T              # (A, 2F)
    b = jnp.asarray(proj_bias, jnp.float32)
    b_adj = b.at[:F].add(1.0)                                   # fold the +1
    return w_t, b_adj


def _pick_row_tile(N, F, B):
    """Row tile: big blocks for HBM roofline, bounded by VMEM and grid length."""
    # Per-row VMEM bytes: x/out double buffers (4F words), lane-padded batch
    # index block (2*128), and an allowance for in-kernel f32 temporaries
    # (x, centered, xn, ss(2F), scale/shift, cast output, onehot(B)).
    per_row = 4 * (4 * F + 2 * 128 + 10 * F + _round_up(B, 128))
    rt_vmem = max(8, (_ROWS_VMEM_BUDGET // per_row) // 8 * 8)
    rt_blk = max(8, (_BLOCK_BYTES_TARGET // (4 * F)) // 8 * 8)
    # Don't collapse the grid below ~8 steps: keeps v7x's 2nd TensorCore busy.
    rt_steps = max(8, _round_up(_cdiv(N, _TARGET_MIN_GRID_STEPS), 8))
    rt = max(8, min(rt_vmem, rt_blk, rt_steps) // 8 * 8)
    return rt, per_row


@jax.jit
def adaptive_layer_norm(x, cond, batch, w_t, b_adj):
    """
    x     : (N, F)  float32
    cond  : (B, A)  float32
    batch : (N,)    int    (maps each row of x to a row of cond)
    w_t   : (A, 2F) float32   b_adj : (2F,) float32  (scale half already +1)
    """
    N, F = x.shape
    B = cond.shape[0]

    # Tiny projection stays in XLA: ONE (B,A)@(A,2F) matmul -> (B, 2F) table.
    table = (cond @ w_t + b_adj).astype(jnp.float32)

    rt, per_row = _pick_row_tile(N, F, B)
    grid = (_cdiv(N, rt),)                 # partial last block: OOB rows discarded
    batch2d = batch.astype(jnp.int32).reshape(N, 1)

    # Declare VMEM needs explicitly (estimate + headroom, capped for v7x).
    vmem_est = per_row * rt + 2 * _round_up(B, 8) * _round_up(2 * F, 128) * 4
    vmem_limit = int(min(_VMEM_LIMIT_CAP, max(16 * _MIB, vmem_est + 12 * _MIB)))

    cost = pl.CostEstimate(
        flops=int(8 * N * F + 2 * N * B * 2 * F),
        transcendentals=int(N),
        bytes_accessed=int(2 * N * F * 4 + N * 4 + B * 2 * F * 4),
    )

    return pl.pallas_call(
        _adaln_kernel,
        out_shape=jax.ShapeDtypeStruct((N, F), x.dtype),
        grid_spec=pltpu.PrefetchScalarGridSpec(
            num_scalar_prefetch=0,
            grid=grid,
            in_specs=[
                pl.BlockSpec((rt, F), lambda i: (i, 0)),       # x row tile
                pl.BlockSpec((rt, 1), lambda i: (i, 0)),       # batch index tile
                pl.BlockSpec((B, 2 * F), lambda i: (0, 0)),    # resident [scale|shift]
            ],
            out_specs=pl.BlockSpec((rt, F), lambda i: (i, 0)),
        ),
        compiler_params=pltpu.CompilerParams(
            dimension_semantics=("parallel",),
            vmem_limit_bytes=vmem_limit),
        cost_estimate=cost,
    )(x, batch2d, table)


# ------------------------------- reference ---------------------------------- #

def _reference(x, cond, batch, proj_weight, proj_bias):
    params = cond @ proj_weight.T + proj_bias
    F = x.shape[-1]
    scale = 1.0 + params[:, :F]
    shift = params[:, F:]
    scale = scale[batch]
    shift = shift[batch]
    mean = jnp.mean(x, axis=-1, keepdims=True)
    var = jnp.mean((x - mean) ** 2, axis=-1, keepdims=True)
    xn = (x - mean) / jnp.sqrt(var + LN_EPS)
    return shift + xn * scale


# --------------------------------- main ------------------------------------- #

if __name__ == "__main__":
    features = 128            # lane-dense output (multiple of 128 lanes)
    adaptive_features = 32
    B = 4                     # number of condition rows (graphs)
    N = 200                   # ragged vs the row tile -> exercises partial-block path

    key = jax.random.PRNGKey(0)
    k_x, k_c, k_w, k_b = jax.random.split(key, 4)

    x = jax.random.normal(k_x, (N, features), dtype=jnp.float32)
    cond = jax.random.normal(k_c, (B, adaptive_features), dtype=jnp.float32)
    batch = jnp.repeat(jnp.arange(B, dtype=jnp.int32), N // B)      # (N,)

    # Deterministic synthetic parameters (nn.Linear(adaptive_features, 2*features)).
    proj_weight = 0.05 * jax.random.normal(
        k_w, (2 * features, adaptive_features), dtype=jnp.float32)
    proj_bias = 0.01 * jax.random.normal(k_b, (2 * features,), dtype=jnp.float32)

    w_t, b_adj = prepare_adaln_params(proj_weight, proj_bias)

    out = adaptive_layer_norm(x, cond, batch, w_t, b_adj)
    out = jax.block_until_ready(out)

    ref = _reference(x, cond, batch, proj_weight, proj_bias)
    assert out.shape == (N, features)
    assert jnp.allclose(out, ref, atol=5e-5, rtol=5e-5), "mismatch vs reference"

    print("KERNEL_OK")
</pallas_src>

<mosaic_0001>
module attributes {stable_mosaic.version = 11 : i64} {
  func.func @_adaln_kernel(%arg0: i32, %arg1: memref<32x128xf32, #tpu.memory_space<vmem>>, %arg2: memref<32x1xi32, #tpu.memory_space<vmem>>, %arg3: memref<4x256xf32, #tpu.memory_space<vmem>>, %arg4: memref<32x128xf32, #tpu.memory_space<vmem>>) attributes {dimension_semantics = [#tpu.dimension_semantics<parallel>], iteration_bounds = array<i64: 7>, scalar_prefetch = 0 : i64, scratch_operands = 0 : i64, tpu.core_type = #tpu.core_type<tc>, window_params = [{transform_indices = @transform_0, window_bounds = array<i64: 32, 128>}, {transform_indices = @transform_1, window_bounds = array<i64: 32, 1>}, {pipeline_mode = #tpu.pipeline_mode<synchronous>, transform_indices = @transform_2, window_bounds = array<i64: 4, 256>}, {transform_indices = @transform_3, window_bounds = array<i64: 32, 128>}]} {
    %c0 = arith.constant 0 : index
    %c0_0 = arith.constant 0 : index
    %0 = vector.load %arg1[%c0, %c0_0] : memref<32x128xf32, #tpu.memory_space<vmem>>, vector<32x128xf32>
    %c0_1 = arith.constant 0 : index
    %c0_2 = arith.constant 0 : index
    %1 = vector.load %arg2[%c0_1, %c0_2] : memref<32x1xi32, #tpu.memory_space<vmem>>, vector<32x1xi32>
    %2 = tpu.iota {dimensions = array<i32: 1>} : vector<32x4xi32>
    %3 = vector.broadcast %1 : vector<32x1xi32> to vector<32x4xi32>
    %4 = arith.cmpi eq, %2, %3 : vector<32x4xi32>
    %5 = arith.extui %4 : vector<32x4xi1> to vector<32x4xi32>
    %6 = arith.sitofp %5 : vector<32x4xi32> to vector<32x4xf32>
    %c0_3 = arith.constant 0 : index
    %c0_4 = arith.constant 0 : index
    %7 = vector.load %arg3[%c0_3, %c0_4] : memref<4x256xf32, #tpu.memory_space<vmem>>, vector<4x256xf32>
    %cst = arith.constant dense<0.000000e+00> : vector<32x256xf32>
    %8 = tpu.matmul %6, %7, %cst {dimension_numbers = #tpu.dot_dimension_numbers<[1], [0], [0], [1], [0, 0, 1, 1], [], []>, precision = #tpu.contract_precision<fp32>} : vector<32x4xf32>, vector<4x256xf32>, vector<32x256xf32> -> vector<32x256xf32>
    %9 = vector.extract_strided_slice %8 {offsets = [0, 0], sizes = [32, 128], strides = [1, 1]} : vector<32x256xf32> to vector<32x128xf32>
    %10 = vector.extract_strided_slice %8 {offsets = [0, 128], sizes = [32, 128], strides = [1, 1]} : vector<32x256xf32> to vector<32x128xf32>
    %cst_5 = arith.constant dense<0.000000e+00> : vector<32xf32>
    %11 = vector.multi_reduction <add>, %0, %cst_5 [1] : vector<32x128xf32> to vector<32xf32>
    %12 = vector.shape_cast %11 : vector<32xf32> to vector<32x1xf32>
    %cst_6 = arith.constant 1.280000e+02 : f32
    %13 = vector.broadcast %cst_6 : f32 to vector<32x1xf32>
    %14 = arith.divf %12, %13 : vector<32x1xf32>
    %15 = vector.broadcast %14 : vector<32x1xf32> to vector<32x128xf32>
    %16 = arith.subf %0, %15 : vector<32x128xf32>
    %17 = arith.mulf %16, %16 : vector<32x128xf32>
    %cst_7 = arith.constant dense<0.000000e+00> : vector<32xf32>
    %18 = vector.multi_reduction <add>, %17, %cst_7 [1] : vector<32x128xf32> to vector<32xf32>
    %19 = vector.shape_cast %18 : vector<32xf32> to vector<32x1xf32>
    %cst_8 = arith.constant 1.280000e+02 : f32
    %20 = vector.broadcast %cst_8 : f32 to vector<32x1xf32>
    %21 = arith.divf %19, %20 : vector<32x1xf32>
    %cst_9 = arith.constant 9.99999974E-6 : f32
    %22 = vector.broadcast %cst_9 : f32 to vector<32x1xf32>
    %23 = arith.addf %21, %22 : vector<32x1xf32>
    %24 = math.rsqrt %23 : vector<32x1xf32>
    %25 = vector.broadcast %24 : vector<32x1xf32> to vector<32x128xf32>
    %26 = arith.mulf %16, %25 : vector<32x128xf32>
    %27 = arith.mulf %26, %9 : vector<32x128xf32>
    %28 = arith.addf %10, %27 : vector<32x128xf32>
    %c0_10 = arith.constant 0 : index
    %c0_11 = arith.constant 0 : index
    %29 = vector.load %arg4[%c0_10, %c0_11] : memref<32x128xf32, #tpu.memory_space<vmem>>, vector<32x128xf32>
    tpu.vector_store %arg4[%c0_10, %c0_11], %28 {strides = array<i32>} : memref<32x128xf32, #tpu.memory_space<vmem>>, vector<32x128xf32>,
    return
  }
  func.func @transform_0(%arg0: i32) -> (i32, i32) {
    %c0_i32 = arith.constant 0 : i32
    %c0_i32_0 = arith.constant 0 : i32
    return %arg0, %c0_i32 : i32, i32
  }
  func.func @transform_1(%arg0: i32) -> (i32, i32) {
    %c0_i32 = arith.constant 0 : i32
    %c0_i32_0 = arith.constant 0 : i32
    return %arg0, %c0_i32 : i32, i32
  }
  func.func @transform_2(%arg0: i32) -> (i32, i32) {
    %c0_i32 = arith.constant 0 : i32
    %c0_i32_0 = arith.constant 0 : i32
    %c0_i32_1 = arith.constant 0 : i32
    return %c0_i32, %c0_i32_0 : i32, i32
  }
  func.func @transform_3(%arg0: i32) -> (i32, i32) {
    %c0_i32 = arith.constant 0 : i32
    %c0_i32_0 = arith.constant 0 : i32
    return %arg0, %c0_i32 : i32, i32
  }
}

</mosaic_0001>

<llo_original>
// kernel: adaptive_layer_norm.1
$region0: #{adaptive_layer_norm.1}
  #allocation0 [shape = 'u32[]', space=smem, size = 0x4, offset = 0x4, fixed_abs, tag = 'smem constant byte address 0x4 - core index']
  #allocation1 [shape = 'u32[144,128]{1,0:T(1,128)}', space=vmem, size = 0x12000, scoped, tag = 'internal scratch']
  %s0 = inlined_call_operand.vmem [shape: f32[200,128], index: 0, kind: input, shape index: {}]
  %s1 = inlined_call_operand.vmem [shape: s32[200,1], index: 1, kind: input, shape index: {}]
  %s2 = inlined_call_operand.vmem [shape: f32[4,256], index: 2, kind: input, shape index: {}]
  %s3 = inlined_call_operand.hbm [shape: f32[200,128], index: 3, kind: output, shape index: {}]
  %s4 = sld [smem:[#allocation0]]
  $region45: #{adaptive_layer_norm.1} parent=0
    _
  %s6 = ssub.s32 1, %s4
  %s7 = scalar_select 0, %s6, %s4
  $region1: #{adaptive_layer_norm.1} parent=0
    #allocation2 [shape = 'u8[32768]{0}', space=vmem, size = 0x8000, scoped, tag = 'output window, operand 0']
    #allocation3 [shape = 's32[2]{0}', space=sflag, size = 0x8, scoped, tag = 'scoped memory for adaptive_layer_norm.1']
    %8 = vsyncpa [#allocation3], 0
    %s9 = scalar_lea.sflag [#allocation3], 1
    %10 = vsyncpa %s9, 0
    loop: start=0, step=1, limit=9
    $region2: #{adaptive_layer_norm.1} parent=1 // loop_pre_header
      _
    $region3: #{adaptive_layer_norm.1} parent=1 // loop_header
      %s12 = sphi 0, %s16
      %p13 = scmp.ge.s32.totalorder %s12, 9
      %s22 = sphi 0, %s24
      %s25 = sphi 0, %s22
      %s26 = sphi 0, %s25
      %s42 = sphi 0, %s26
      %s48 = sphi 0, %s50
      %s51 = sphi 0, %s48
      %s52 = sphi 0, %s51
      %s68 = sphi 0, %s52
      %s72 = sphi 0, %s72
      %s74 = sphi 0, %s72
      %s75 = sphi 0, %s74
      %s89 = sphi 0, %s75
      %s95 = sphi 0, %s97
      %s98 = sphi 0, %s95
      %s99 = sphi 0, %s98
      %s115 = sphi 0, %s99
    $region4: #{adaptive_layer_norm.1} parent=1 // loop_header_branch
      %15 = sbr.rel (%p13) target = $region8
    $region5: #{adaptive_layer_norm.1} parent=1 // loop_body
      %s17 = ssub.s32 %s12, 1
      %s18 = ssub.s32 %s12, 2
      %s19 = sadd.s32 %s12, 1
      %s20 = ssub.s32 %s12, %s19
      %p21 = scmp.eq.s32.totalorder %s20, 0
      %s23 = sadd.s32 %s22, 1
      %s24 = scalar_select %p21, %s22, %s23
      %p27 = pneg %p21
      %p28 = scmp.eq.s32.totalorder %s12, 6
      %p29 = por %p27, %p28
      %p30 = scmp.ne.s32.totalorder %s22, %s25
      %p31 = scmp.eq.s32.totalorder %s12, 0
      %p32 = por %p30, %p31
      %p33 = scmp.ne.s32.totalorder %s22, %s25
      %p34 = scmp.eq.s32.totalorder %s17, 6
      %p35 = por %p33, %p34
      %p36 = scmp.ne.s32.totalorder %s25, %s26
      %p37 = scmp.eq.s32.totalorder %s17, 0
      %p38 = por %p36, %p37
      %p39 = scmp.ne.s32.totalorder %s25, %s26
      %p40 = scmp.eq.s32.totalorder %s18, 6
      %p41 = por %p39, %p40
      %p43 = scmp.ne.s32.totalorder %s26, %s42
      %p44 = scmp.eq.s32.totalorder %s18, 0
      %p45 = por %p43, %p44
      %s46 = ssub.s32 %s12, %s19
      %p47 = scmp.eq.s32.totalorder %s46, 0
      %s49 = sadd.s32 %s48, 1
      %s50 = scalar_select %p47, %s48, %s49
      %p53 = pneg %p47
      %p54 = scmp.eq.s32.totalorder %s12, 6
      %p55 = por %p53, %p54
      %p56 = scmp.ne.s32.totalorder %s48, %s51
      %p57 = scmp.eq.s32.totalorder %s12, 0
      %p58 = por %p56, %p57
      %p59 = scmp.ne.s32.totalorder %s48, %s51
      %p60 = scmp.eq.s32.totalorder %s17, 6
      %p61 = por %p59, %p60
      %p62 = scmp.ne.s32.totalorder %s51, %s52
      %p63 = scmp.eq.s32.totalorder %s17, 0
      %p64 = por %p62, %p63
      %p65 = scmp.ne.s32.totalorder %s51, %s52
      %p66 = scmp.eq.s32.totalorder %s18, 6
      %p67 = por %p65, %p66
      %p69 = scmp.ne.s32.totalorder %s52, %s68
      %p70 = scmp.eq.s32.totalorder %s18, 0
      %p71 = por %p69, %p70
      %s73 = sadd.s32 %s72, 1
      %p76 = scmp.eq.s32.totalorder %s12, 6
      %p77 = scmp.ne.s32.totalorder %s72, %s74
      %p78 = scmp.eq.s32.totalorder %s12, 0
      %p79 = por %p77, %p78
      %p80 = scmp.ne.s32.totalorder %s72, %s74
      %p81 = scmp.eq.s32.totalorder %s17, 6
      %p82 = por %p80, %p81
      %p83 = scmp.ne.s32.totalorder %s74, %s75
      %p84 = scmp.eq.s32.totalorder %s17, 0
      %p85 = por %p83, %p84
      %p86 = scmp.ne.s32.totalorder %s74, %s75
      %p87 = scmp.eq.s32.totalorder %s18, 6
      %p88 = por %p86, %p87
      %p90 = scmp.ne.s32.totalorder %s75, %s89
      %p91 = scmp.eq.s32.totalorder %s18, 0
      %p92 = por %p90, %p91
      %s93 = ssub.s32 %s12, %s19
      %p94 = scmp.eq.s32.totalorder %s93, 0
      %s96 = sadd.s32 %s95, 1
      %s97 = scalar_select %p94, %s95, %s96
      %p100 = pneg %p94
      %p101 = scmp.eq.s32.totalorder %s12, 6
      %p102 = por %p100, %p101
      %p103 = scmp.ne.s32.totalorder %s95, %s98
      %p104 = scmp.eq.s32.totalorder %s12, 0
      %p105 = por %p103, %p104
      %p106 = scmp.ne.s32.totalorder %s95, %s98
      %p107 = scmp.eq.s32.totalorder %s17, 6
      %p108 = por %p106, %p107
      %p109 = scmp.ne.s32.totalorder %s98, %s99
      %p110 = scmp.eq.s32.totalorder %s17, 0
      %p111 = por %p109, %p110
      %p112 = scmp.ne.s32.totalorder %s98, %s99
      %p113 = scmp.eq.s32.totalorder %s18, 6
      %p114 = por %p112, %p113
      %p116 = scmp.ne.s32.totalorder %s99, %s115
      %p117 = scmp.eq.s32.totalorder %s18, 0
      %p118 = por %p116, %p117
      %p119 = scmp.le.s32.totalorder 1, %s12
      %p120 = scmp.lt.s32.totalorder %s12, 8
      %p121 = pnand %p119, %p120
      %p122 = pneg %p121
      // Predicated region
      $region9: #{adaptive_layer_norm.1} parent=5 // pred_check
        _
      $region10: #{adaptive_layer_norm.1} parent=5 // pred_check_branch
        %124 = sbr.rel (%p121) target = $region12
      $region11: #{adaptive_layer_norm.1} parent=5 // pred_region
        %s125 = ssub.s32 %s12, 1
        // Predicated region
        $region13: #{adaptive_layer_norm.1} parent=11 // pred_check
          %p126 = pneg %p85
        $region14: #{adaptive_layer_norm.1} parent=11 // pred_check_branch
          %128 = sbr.rel (%p126) target = $region16
        $region15: #{adaptive_layer_norm.1} parent=11 // pred_region
          _
        $region16: #{adaptive_layer_norm.1} parent=11 // pred_fallthru
          _
      $region12: #{adaptive_layer_norm.1} parent=5 // pred_fallthru
        _
      %p129 = scmp.lt.s32.totalorder %s12, 7
      // Predicated region
      $region17: #{adaptive_layer_norm.1} parent=5 // pred_check
        %p130 = pneg %p129
      $region18: #{adaptive_layer_norm.1} parent=5 // pred_check_branch
        %132 = sbr.rel (%p130) target = $region20
      $region19: #{adaptive_layer_norm.1} parent=5 // pred_region
        // Predicated region
        $region21: #{adaptive_layer_norm.1} parent=19 // pred_check
          %p133 = pneg %p32
        $region22: #{adaptive_layer_norm.1} parent=19 // pred_check_branch
          %135 = sbr.rel (%p133) target = $region24
        $region23: #{adaptive_layer_norm.1} parent=19 // pred_region
          %s136 = smul.u32 4, %s12
          %s137 = ssub.s32 25, %s136
          %p138 = scmp.lt.s32.totalorder %s137, 4
          %s139 = scalar_select %p138, %s137, 4
          %s140 = smul.u32 128, %s139
          %p141 = scmp.lt.s32.totalorder %s136, 24
          %s142 = scalar_select %p141, %s136, 24
          %s143 = smul.addr %s142, 8
          %s144 = scalar_lea.vmem %s0, %s143
          %s145 = smul.u32 4, %s12
          %s146 = ssub.s32 25, %s145
          %p147 = scmp.lt.s32.totalorder %s146, 4
          %s148 = scalar_select %p147, %s146, 4
          %s149 = smul.u32 128, %s148
        $region24: #{adaptive_layer_norm.1} parent=19 // pred_fallthru
          _
        // Predicated region
        $region25: #{adaptive_layer_norm.1} parent=19 // pred_check
          %p150 = pneg %p58
        $region26: #{adaptive_layer_norm.1} parent=19 // pred_check_branch
          %152 = sbr.rel (%p150) target = $region28
        $region27: #{adaptive_layer_norm.1} parent=19 // pred_region
          %s153 = smul.u32 4, %s12
          %s154 = ssub.s32 25, %s153
          %p155 = scmp.lt.s32.totalorder %s154, 4
          %s156 = scalar_select %p155, %s154, 4
          %s157 = smul.u32 128, %s156
          %p158 = scmp.lt.s32.totalorder %s153, 24
          %s159 = scalar_select %p158, %s153, 24
          %s160 = smul.addr %s159, 8
          %s161 = scalar_lea.vmem %s1, %s160
          %s162 = smul.u32 4, %s12
          %s163 = ssub.s32 25, %s162
          %p164 = scmp.lt.s32.totalorder %s163, 4
          %s165 = scalar_select %p164, %s163, 4
          %s166 = smul.u32 128, %s165
        $region28: #{adaptive_layer_norm.1} parent=19 // pred_fallthru
          _
      $region20: #{adaptive_layer_norm.1} parent=5 // pred_fallthru
        _
      %p167 = scmp.le.s32.totalorder 1, %s12
      %p168 = scmp.lt.s32.totalorder %s12, 8
      %p169 = pnand %p167, %p168
      %p170 = pneg %p169
      // Predicated region
      $region29: #{adaptive_layer_norm.1} parent=5 // pred_check
        _
      $region30: #{adaptive_layer_norm.1} parent=5 // pred_check_branch
        %172 = sbr.rel (%p169) target = $region32
      $region31: #{adaptive_layer_norm.1} parent=5 // pred_region
        %s173 = ssub.s32 %s12, 1
        %s174 = smul.u32 4, %s17
        %s175 = ssub.s32 25, %s174
        %p176 = scmp.lt.s32.totalorder %s175, 4
        %s177 = scalar_select %p176, %s175, 4
        %s178 = smul.u32 128, %s177
        %p179 = scmp.lt.s32.totalorder %s174, 24
        %s180 = scalar_select %p179, %s174, 24
        %s181 = smul.addr %s180, 8
        %s182 = scalar_lea.vmem %s0, %s181
        %p183 = pneg %p38
        %p184 = pneg %p35
        %s185 = smul.u32 4, %s17
        %s186 = ssub.s32 25, %s185
        %p187 = scmp.lt.s32.totalorder %s186, 4
        %s188 = scalar_select %p187, %s186, 4
        %s189 = smul.u32 128, %s188
        %p190 = scmp.lt.s32.totalorder %s185, 24
        %s191 = scalar_select %p190, %s185, 24
        %s192 = smul.addr %s191, 8
        %s193 = scalar_lea.vmem %s1, %s192
        %p194 = pneg %p64
        %p195 = pneg %p61
        %p196 = pneg %p85
        %p197 = pneg %p82
        %p198 = pneg %p111
        %p199 = pneg %p108
        %s200 = sand.u32 %s98, 1
        %s201 = scalar_lea.sflag [#allocation3], %s200
        %s202 = sand.u32 %s98, 1
        %s203 = smul.addr %s202, 32
        %s204 = scalar_lea.vmem [#allocation2], %s203
        %s205 = smul.u32 4, %s17
        %s206 = ssub.s32 25, %s205
        %p207 = scmp.lt.s32.totalorder %s206, 4
        %s208 = scalar_select %p207, %s206, 4
        %s209 = smul.u32 128, %s208
        %p210 = scmp.lt.s32.totalorder %s205, 24
        %s211 = scalar_select %p210, %s205, 24
        %s212 = smul.addr %s211, 8
        %s213 = scalar_lea.vmem %s0, %s212
        %s214 = smul.u32 4, %s17
        %s215 = ssub.s32 25, %s214
        %p216 = scmp.lt.s32.totalorder %s215, 4
        %s217 = scalar_select %p216, %s215, 4
        %s218 = smul.u32 128, %s217
        %s219 = smul.u32 4, %s17
        %s220 = ssub.s32 25, %s219
        %p221 = scmp.lt.s32.totalorder %s220, 4
        %s222 = scalar_select %p221, %s220, 4
        %s223 = smul.u32 128, %s222
        %p224 = scmp.lt.s32.totalorder %s219, 24
        %s225 = scalar_select %p224, %s219, 24
        %s226 = smul.addr %s225, 8
        %s227 = scalar_lea.vmem %s1, %s226
        %s228 = smul.u32 4, %s17
        %s229 = ssub.s32 25, %s228
        %p230 = scmp.lt.s32.totalorder %s229, 4
        %s231 = scalar_select %p230, %s229, 4
        %s232 = smul.u32 128, %s231
        %s233 = smul.u32 4, %s17
        %s234 = ssub.s32 25, %s233
        %p235 = scmp.lt.s32.totalorder %s234, 4
        %s236 = scalar_select %p235, %s234, 4
        %s237 = smul.u32 128, %s236
        %v238 = vld [vmem:[%s213] sm:$0xff]
        %v239 = vld [vmem:[%s213 + $0x8] sm:$0xff]
        %v240 = vld [vmem:[%s213 + $0x10] sm:$0xff]
        %v241 = vld [vmem:[%s213 + $0x18] sm:$0xff]
        %v242 = vld [vmem:[%s227] sm:$0xff]
        %v243 = vld [vmem:[%s227 + $0x8] sm:$0xff]
        %v244 = vld [vmem:[%s227 + $0x10] sm:$0xff]
        %v245 = vld [vmem:[%s227 + $0x18] sm:$0xff]
        %v246 = vlaneseq
        %v247 = vand.u32 %v246, 127
        %248 = vset.pattern.permute.xlu0 0
        %249 = vperm.xlu0 %248, %v242
        %v250 = vpop.permute.xlu0 %249
        %251 = vset.pattern.permute.xlu0 0
        %252 = vperm.xlu0 %251, %v243
        %v253 = vpop.permute.xlu0 %252
        %254 = vset.pattern.permute.xlu0 0
        %255 = vperm.xlu0 %254, %v244
        %v256 = vpop.permute.xlu0 %255
        %257 = vset.pattern.permute.xlu0 0
        %258 = vperm.xlu0 %257, %v245
        %v259 = vpop.permute.xlu0 %258
        %vm260 = vcmp.eq.s32.totalorder %v247, %v250
        %vm261 = vcmp.eq.s32.totalorder %v247, %v253
        %vm262 = vcmp.eq.s32.totalorder %v247, %v256
        %vm263 = vcmp.eq.s32.totalorder %v247, %v259
        %v264 = vsel %vm260, 1, 0
        %v265 = vsel %vm261, 1, 0
        %v266 = vsel %vm262, 1, 0
        %v267 = vsel %vm263, 1, 0
        %v268 = vcvt.s32.f32 %v264
        %v269 = vcvt.s32.f32 %v265
        %v270 = vcvt.s32.f32 %v266
        %v271 = vcvt.s32.f32 %v267
        %v272 = vld [vmem:[%s2] sm:$0xff]
        %v274 = vcombine.high %v272, %v272
        %vm275 = vcmask 31744
        %v277 = vsel %vm275, %v268, 0
        %v280 = vsel %vm275, %v269, 0
        %v283 = vsel %vm275, %v270, 0
        %v286 = vsel %vm275, %v271, 0
        %vm288 = vcmask 1043456
        %v289 = vsel %vm288, %v272, 0
        %v291 = vsel %vm288, %v274, 0
        %293 = vmatprep.subr.mxu0 0.0
        %294 = vmatpush1.msra.mxu0 0.0
        %295 = vmatprep.subr.mxu0 0.0
        %296 = vmatpush1.msra.mxu0 0.0
        %297 = vmatprep.subr.mxu0 0.0
        %298 = vmatpush1.msra.mxu0 0.0
        %299 = vmatprep.subr.mxu0 0.0
        %300 = vmatpush1.msra.mxu0 0.0
        %301 = vmatprep.subr.mxu0 0.0
        %302 = vmatpush1.msra.mxu0 0.0
        %303 = vmatprep.subr.mxu0 0.0
        %304 = vmatpush1.msra.mxu0 0.0
        %305 = vmatprep.subr.mxu0 0.0
        %306 = vmatpush1.msra.mxu0 0.0
        %307 = vmatprep.subr.mxu0 0.0
        %308 = vmatpush1.msra.mxu0 0.0
        %309 = vmatprep.subr.mxu0 0.0
        %310 = vmatpush1.msra.mxu0 0.0
        %311 = vmatprep.subr.mxu0 0.0
        %312 = vmatpush1.msra.mxu0 0.0
        %313 = vmatprep.subr.mxu0 0.0
        %314 = vmatpush1.msra.mxu0 0.0
        %315 = vmatprep.subr.mxu0 0.0
        %316 = vmatpush1.msra.mxu0 0.0
        %317 = vmatprep.subr.mxu0 0.0
        %318 = vmatpush1.msra.mxu0 0.0
        %319 = vmatprep.subr.mxu0 0.0
        %320 = vmatpush1.msra.mxu0 0.0
        %321 = vmatprep.subr.mxu0 0.0
        %322 = vmatpush1.msra.mxu0 0.0
        %v323 = vand.u32 %v291, 4294901760
        %324 = vmatprep.subr.mxu0 %v323
        %v325 = vand.u32 %v289, 4294901760
        %326 = vmatpush1.msra.mxu0 %v325
        %327 = vmatprep.subr.mxu0 0.0
        %328 = vmatpush2.msra.mxu0 0.0
        %329 = vmatprep.subr.mxu0 0.0
        %330 = vmatpush2.msra.mxu0 0.0
        %331 = vmatprep.subr.mxu0 0.0
        %332 = vmatpush2.msra.mxu0 0.0
        %333 = vmatprep.subr.mxu0 0.0
        %334 = vmatpush2.msra.mxu0 0.0
        %335 = vmatprep.subr.mxu0 0.0
        %336 = vmatpush2.msra.mxu0 0.0
        %337 = vmatprep.subr.mxu0 0.0
        %338 = vmatpush2.msra.mxu0 0.0
        %339 = vmatprep.subr.mxu0 0.0
        %340 = vmatpush2.msra.mxu0 0.0
        %341 = vmatprep.subr.mxu0 0.0
        %342 = vmatpush2.msra.mxu0 0.0
        %343 = vmatprep.subr.mxu0 0.0
        %344 = vmatpush2.msra.mxu0 0.0
        %345 = vmatprep.subr.mxu0 0.0
        %346 = vmatpush2.msra.mxu0 0.0
        %347 = vmatprep.subr.mxu0 0.0
        %348 = vmatpush2.msra.mxu0 0.0
        %349 = vmatprep.subr.mxu0 0.0
        %350 = vmatpush2.msra.mxu0 0.0
        %351 = vmatprep.subr.mxu0 0.0
        %352 = vmatpush2.msra.mxu0 0.0
        %353 = vmatprep.subr.mxu0 0.0
        %354 = vmatpush2.msra.mxu0 0.0
        %355 = vmatprep.subr.mxu0 0.0
        %356 = vmatpush2.msra.mxu0 0.0
        %357 = vmatprep.subr.mxu0 0.0
        %358 = vmatpush2.msra.mxu0 0.0
        %359 = vmatprep.mubr.f32.mxu0 0.0
        %v360 = vand.u32 %v277, 4294901760
        %v361 = vsub.f32 %v277, %v360
        %v362 = vand.u32 %v361, 4294901760
        %v363 = vsub.f32 %v361, %v362
        %v364 = vand.u32 %v363, 4294901760
        %365 = vmatmul.mubr.f32.gmra.mxu0 %v364
        %v366 = vpop.f32.mrf.mxu0
        %v367 = vadd.f32 0.0, %v366
        %v368 = vpop.f32.mrf.mxu0
        %v369 = vadd.f32 0.0, %v368
        %370 = vmatprep.mubr.f32.mxu0 0.0
        %v371 = vand.u32 %v280, 4294901760
        %v372 = vsub.f32 %v280, %v371
        %v373 = vand.u32 %v372, 4294901760
        %v374 = vsub.f32 %v372, %v373
        %v375 = vand.u32 %v374, 4294901760
        %376 = vmatmul.mubr.f32.gmra.mxu0 %v375
        %v377 = vpop.f32.mrf.mxu0
        %v378 = vadd.f32 0.0, %v377
        %v379 = vpop.f32.mrf.mxu0
        %v380 = vadd.f32 0.0, %v379
        %381 = vmatprep.mubr.f32.mxu0 0.0
        %v382 = vand.u32 %v283, 4294901760
        %v383 = vsub.f32 %v283, %v382
        %v384 = vand.u32 %v383, 4294901760
        %v385 = vsub.f32 %v383, %v384
        %v386 = vand.u32 %v385, 4294901760
        %387 = vmatmul.mubr.f32.gmra.mxu0 %v386
        %v388 = vpop.f32.mrf.mxu0
        %v389 = vadd.f32 0.0, %v388
        %v390 = vpop.f32.mrf.mxu0
        %v391 = vadd.f32 0.0, %v390
        %392 = vmatprep.mubr.f32.mxu0 0.0
        %v393 = vand.u32 %v286, 4294901760
        %v394 = vsub.f32 %v286, %v393
        %v395 = vand.u32 %v394, 4294901760
        %v396 = vsub.f32 %v394, %v395
        %v397 = vand.u32 %v396, 4294901760
        %398 = vmatmul.mubr.f32.gmra.mxu0 %v397
        %v399 = vpop.f32.mrf.mxu0
        %v400 = vadd.f32 0.0, %v399
        %v401 = vpop.f32.mrf.mxu0
        %v402 = vadd.f32 0.0, %v401
        %403 = vdwg.mxu0
        %404 = vmatprep.subr.mxu0 0.0
        %405 = vmatpush1.msra.mxu0 0.0
        %406 = vmatprep.subr.mxu0 0.0
        %407 = vmatpush1.msra.mxu0 0.0
        %408 = vmatprep.subr.mxu0 0.0
        %409 = vmatpush1.msra.mxu0 0.0
        %410 = vmatprep.subr.mxu0 0.0
        %411 = vmatpush1.msra.mxu0 0.0
        %412 = vmatprep.subr.mxu0 0.0
        %413 = vmatpush1.msra.mxu0 0.0
        %414 = vmatprep.subr.mxu0 0.0
        %415 = vmatpush1.msra.mxu0 0.0
        %416 = vmatprep.subr.mxu0 0.0
        %417 = vmatpush1.msra.mxu0 0.0
        %418 = vmatprep.subr.mxu0 0.0
        %419 = vmatpush1.msra.mxu0 0.0
        %420 = vmatprep.subr.mxu0 0.0
        %421 = vmatpush1.msra.mxu0 0.0
        %422 = vmatprep.subr.mxu0 0.0
        %423 = vmatpush1.msra.mxu0 0.0
        %424 = vmatprep.subr.mxu0 0.0
        %425 = vmatpush1.msra.mxu0 0.0
        %426 = vmatprep.subr.mxu0 0.0
        %427 = vmatpush1.msra.mxu0 0.0
        %428 = vmatprep.subr.mxu0 0.0
        %429 = vmatpush1.msra.mxu0 0.0
        %430 = vmatprep.subr.mxu0 0.0
        %431 = vmatpush1.msra.mxu0 0.0
        %432 = vmatprep.subr.mxu0 0.0
        %433 = vmatpush1.msra.mxu0 0.0
        %v434 = vand.u32 %v291, 4294901760
        %v435 = vsub.f32 %v291, %v434
        %v436 = vand.u32 %v435, 4294901760
        %v437 = vsub.f32 %v435, %v436
        %v438 = vand.u32 %v437, 4294901760
        %439 = vmatprep.subr.mxu0 %v438
        %v440 = vand.u32 %v289, 4294901760
        %v441 = vsub.f32 %v289, %v440
        %v442 = vand.u32 %v441, 4294901760
        %v443 = vsub.f32 %v441, %v442
        %v444 = vand.u32 %v443, 4294901760
        %445 = vmatpush1.msra.mxu0 %v444
        %446 = vmatprep.subr.mxu0 0.0
        %447 = vmatpush2.msra.mxu0 0.0
        %448 = vmatprep.subr.mxu0 0.0
        %449 = vmatpush2.msra.mxu0 0.0
        %450 = vmatprep.subr.mxu0 0.0
        %451 = vmatpush2.msra.mxu0 0.0
        %452 = vmatprep.subr.mxu0 0.0
        %453 = vmatpush2.msra.mxu0 0.0
        %454 = vmatprep.subr.mxu0 0.0
        %455 = vmatpush2.msra.mxu0 0.0
        %456 = vmatprep.subr.mxu0 0.0
        %457 = vmatpush2.msra.mxu0 0.0
        %458 = vmatprep.subr.mxu0 0.0
        %459 = vmatpush2.msra.mxu0 0.0
        %460 = vmatprep.subr.mxu0 0.0
        %461 = vmatpush2.msra.mxu0 0.0
        %462 = vmatprep.subr.mxu0 0.0
        %463 = vmatpush2.msra.mxu0 0.0
        %464 = vmatprep.subr.mxu0 0.0
        %465 = vmatpush2.msra.mxu0 0.0
        %466 = vmatprep.subr.mxu0 0.0
        %467 = vmatpush2.msra.mxu0 0.0
        %468 = vmatprep.subr.mxu0 0.0
        %469 = vmatpush2.msra.mxu0 0.0
        %470 = vmatprep.subr.mxu0 0.0
        %471 = vmatpush2.msra.mxu0 0.0
        %472 = vmatprep.subr.mxu0 0.0
        %473 = vmatpush2.msra.mxu0 0.0
        %474 = vmatprep.subr.mxu0 0.0
        %475 = vmatpush2.msra.mxu0 0.0
        %476 = vmatprep.subr.mxu0 0.0
        %477 = vmatpush2.msra.mxu0 0.0
        %478 = vmatprep.mubr.f32.mxu0 0.0
        %v479 = vand.u32 %v277, 4294901760
        %480 = vmatmul.mubr.f32.gmra.mxu0 %v479
        %v481 = vpop.f32.mrf.mxu0
        %v482 = vadd.f32 %v367, %v481
        %v483 = vpop.f32.mrf.mxu0
        %v484 = vadd.f32 %v369, %v483
        %485 = vmatprep.mubr.f32.mxu0 0.0
        %v486 = vand.u32 %v280, 4294901760
        %487 = vmatmul.mubr.f32.gmra.mxu0 %v486
        %v488 = vpop.f32.mrf.mxu0
        %v489 = vadd.f32 %v378, %v488
        %v490 = vpop.f32.mrf.mxu0
        %v491 = vadd.f32 %v380, %v490
        %492 = vmatprep.mubr.f32.mxu0 0.0
        %v493 = vand.u32 %v283, 4294901760
        %494 = vmatmul.mubr.f32.gmra.mxu0 %v493
        %v495 = vpop.f32.mrf.mxu0
        %v496 = vadd.f32 %v389, %v495
        %v497 = vpop.f32.mrf.mxu0
        %v498 = vadd.f32 %v391, %v497
        %499 = vmatprep.mubr.f32.mxu0 0.0
        %v500 = vand.u32 %v286, 4294901760
        %501 = vmatmul.mubr.f32.gmra.mxu0 %v500
        %v502 = vpop.f32.mrf.mxu0
        %v503 = vadd.f32 %v400, %v502
        %v504 = vpop.f32.mrf.mxu0
        %v505 = vadd.f32 %v402, %v504
        %506 = vdwg.mxu0
        %507 = vmatprep.subr.mxu0 0.0
        %508 = vmatpush1.msra.mxu0 0.0
        %509 = vmatprep.subr.mxu0 0.0
        %510 = vmatpush1.msra.mxu0 0.0
        %511 = vmatprep.subr.mxu0 0.0
        %512 = vmatpush1.msra.mxu0 0.0
        %513 = vmatprep.subr.mxu0 0.0
        %514 = vmatpush1.msra.mxu0 0.0
        %515 = vmatprep.subr.mxu0 0.0
        %516 = vmatpush1.msra.mxu0 0.0
        %517 = vmatprep.subr.mxu0 0.0
        %518 = vmatpush1.msra.mxu0 0.0
        %519 = vmatprep.subr.mxu0 0.0
        %520 = vmatpush1.msra.mxu0 0.0
        %521 = vmatprep.subr.mxu0 0.0
        %522 = vmatpush1.msra.mxu0 0.0
        %523 = vmatprep.subr.mxu0 0.0
        %524 = vmatpush1.msra.mxu0 0.0
        %525 = vmatprep.subr.mxu0 0.0
        %526 = vmatpush1.msra.mxu0 0.0
        %527 = vmatprep.subr.mxu0 0.0
        %528 = vmatpush1.msra.mxu0 0.0
        %529 = vmatprep.subr.mxu0 0.0
        %530 = vmatpush1.msra.mxu0 0.0
        %531 = vmatprep.subr.mxu0 0.0
        %532 = vmatpush1.msra.mxu0 0.0
        %533 = vmatprep.subr.mxu0 0.0
        %534 = vmatpush1.msra.mxu0 0.0
        %535 = vmatprep.subr.mxu0 0.0
        %536 = vmatpush1.msra.mxu0 0.0
        %v537 = vand.u32 %v291, 4294901760
        %v538 = vsub.f32 %v291, %v537
        %539 = vmatprep.subr.mxu0 %v538
        %v540 = vand.u32 %v289, 4294901760
        %v541 = vsub.f32 %v289, %v540
        %542 = vmatpush1.msra.mxu0 %v541
        %543 = vmatprep.subr.mxu0 0.0
        %544 = vmatpush2.msra.mxu0 0.0
        %545 = vmatprep.subr.mxu0 0.0
        %546 = vmatpush2.msra.mxu0 0.0
        %547 = vmatprep.subr.mxu0 0.0
        %548 = vmatpush2.msra.mxu0 0.0
        %549 = vmatprep.subr.mxu0 0.0
        %550 = vmatpush2.msra.mxu0 0.0
        %551 = vmatprep.subr.mxu0 0.0
        %552 = vmatpush2.msra.mxu0 0.0
        %553 = vmatprep.subr.mxu0 0.0
        %554 = vmatpush2.msra.mxu0 0.0
        %555 = vmatprep.subr.mxu0 0.0
        %556 = vmatpush2.msra.mxu0 0.0
        %557 = vmatprep.subr.mxu0 0.0
        %558 = vmatpush2.msra.mxu0 0.0
        %559 = vmatprep.subr.mxu0 0.0
        %560 = vmatpush2.msra.mxu0 0.0
        %561 = vmatprep.subr.mxu0 0.0
        %562 = vmatpush2.msra.mxu0 0.0
        %563 = vmatprep.subr.mxu0 0.0
        %564 = vmatpush2.msra.mxu0 0.0
        %565 = vmatprep.subr.mxu0 0.0
        %566 = vmatpush2.msra.mxu0 0.0
        %567 = vmatprep.subr.mxu0 0.0
        %568 = vmatpush2.msra.mxu0 0.0
        %569 = vmatprep.subr.mxu0 0.0
        %570 = vmatpush2.msra.mxu0 0.0
        %571 = vmatprep.subr.mxu0 0.0
        %572 = vmatpush2.msra.mxu0 0.0
        %573 = vmatprep.subr.mxu0 0.0
        %574 = vmatpush2.msra.mxu0 0.0
        %575 = vmatprep.mubr.f32.mxu0 0.0
        %v576 = vand.u32 %v277, 4294901760
        %v577 = vsub.f32 %v277, %v576
        %578 = vmatmul.mubr.f32.gmra.mxu0 %v577
        %v579 = vpop.f32.mrf.mxu0
        %v580 = vadd.f32 %v482, %v579
        %v581 = vpop.f32.mrf.mxu0
        %v582 = vadd.f32 %v484, %v581
        %583 = vmatprep.mubr.f32.mxu0 0.0
        %v584 = vand.u32 %v280, 4294901760
        %v585 = vsub.f32 %v280, %v584
        %586 = vmatmul.mubr.f32.gmra.mxu0 %v585
        %v587 = vpop.f32.mrf.mxu0
        %v588 = vadd.f32 %v489, %v587
        %v589 = vpop.f32.mrf.mxu0
        %v590 = vadd.f32 %v491, %v589
        %591 = vmatprep.mubr.f32.mxu0 0.0
        %v592 = vand.u32 %v283, 4294901760
        %v593 = vsub.f32 %v283, %v592
        %594 = vmatmul.mubr.f32.gmra.mxu0 %v593
        %v595 = vpop.f32.mrf.mxu0
        %v596 = vadd.f32 %v496, %v595
        %v597 = vpop.f32.mrf.mxu0
        %v598 = vadd.f32 %v498, %v597
        %599 = vmatprep.mubr.f32.mxu0 0.0
        %v600 = vand.u32 %v286, 4294901760
        %v601 = vsub.f32 %v286, %v600
        %602 = vmatmul.mubr.f32.gmra.mxu0 %v601
        %v603 = vpop.f32.mrf.mxu0
        %v604 = vadd.f32 %v503, %v603
        %v605 = vpop.f32.mrf.mxu0
        %v606 = vadd.f32 %v505, %v605
        %607 = vdwg.mxu0
        %608 = vmatprep.subr.mxu0 0.0
        %609 = vmatpush1.msra.mxu0 0.0
        %610 = vmatprep.subr.mxu0 0.0
        %611 = vmatpush1.msra.mxu0 0.0
        %612 = vmatprep.subr.mxu0 0.0
        %613 = vmatpush1.msra.mxu0 0.0
        %614 = vmatprep.subr.mxu0 0.0
        %615 = vmatpush1.msra.mxu0 0.0
        %616 = vmatprep.subr.mxu0 0.0
        %617 = vmatpush1.msra.mxu0 0.0
        %618 = vmatprep.subr.mxu0 0.0
        %619 = vmatpush1.msra.mxu0 0.0
        %620 = vmatprep.subr.mxu0 0.0
        %621 = vmatpush1.msra.mxu0 0.0
        %622 = vmatprep.subr.mxu0 0.0
        %623 = vmatpush1.msra.mxu0 0.0
        %624 = vmatprep.subr.mxu0 0.0
        %625 = vmatpush1.msra.mxu0 0.0
        %626 = vmatprep.subr.mxu0 0.0
        %627 = vmatpush1.msra.mxu0 0.0
        %628 = vmatprep.subr.mxu0 0.0
        %629 = vmatpush1.msra.mxu0 0.0
        %630 = vmatprep.subr.mxu0 0.0
        %631 = vmatpush1.msra.mxu0 0.0
        %632 = vmatprep.subr.mxu0 0.0
        %633 = vmatpush1.msra.mxu0 0.0
        %634 = vmatprep.subr.mxu0 0.0
        %635 = vmatpush1.msra.mxu0 0.0
        %636 = vmatprep.subr.mxu0 0.0
        %637 = vmatpush1.msra.mxu0 0.0
        %v638 = vand.u32 %v291, 4294901760
        %639 = vmatprep.subr.mxu0 %v638
        %v640 = vand.u32 %v289, 4294901760
        %641 = vmatpush1.msra.mxu0 %v640
        %642 = vmatprep.subr.mxu0 0.0
        %643 = vmatpush2.msra.mxu0 0.0
        %644 = vmatprep.subr.mxu0 0.0
        %645 = vmatpush2.msra.mxu0 0.0
        %646 = vmatprep.subr.mxu0 0.0
        %647 = vmatpush2.msra.mxu0 0.0
        %648 = vmatprep.subr.mxu0 0.0
        %649 = vmatpush2.msra.mxu0 0.0
        %650 = vmatprep.subr.mxu0 0.0
        %651 = vmatpush2.msra.mxu0 0.0
        %652 = vmatprep.subr.mxu0 0.0
        %653 = vmatpush2.msra.mxu0 0.0
        %654 = vmatprep.subr.mxu0 0.0
        %655 = vmatpush2.msra.mxu0 0.0
        %656 = vmatprep.subr.mxu0 0.0
        %657 = vmatpush2.msra.mxu0 0.0
        %658 = vmatprep.subr.mxu0 0.0
        %659 = vmatpush2.msra.mxu0 0.0
        %660 = vmatprep.subr.mxu0 0.0
        %661 = vmatpush2.msra.mxu0 0.0
        %662 = vmatprep.subr.mxu0 0.0
        %663 = vmatpush2.msra.mxu0 0.0
        %664 = vmatprep.subr.mxu0 0.0
        %665 = vmatpush2.msra.mxu0 0.0
        %666 = vmatprep.subr.mxu0 0.0
        %667 = vmatpush2.msra.mxu0 0.0
        %668 = vmatprep.subr.mxu0 0.0
        %669 = vmatpush2.msra.mxu0 0.0
        %670 = vmatprep.subr.mxu0 0.0
        %671 = vmatpush2.msra.mxu0 0.0
        %672 = vmatprep.subr.mxu0 0.0
        %673 = vmatpush2.msra.mxu0 0.0
        %674 = vmatprep.mubr.f32.mxu0 0.0
        %v675 = vand.u32 %v277, 4294901760
        %v676 = vsub.f32 %v277, %v675
        %v677 = vand.u32 %v676, 4294901760
        %678 = vmatmul.mubr.f32.gmra.mxu0 %v677
        %v679 = vpop.f32.mrf.mxu0
        %v680 = vadd.f32 %v580, %v679
        %v681 = vpop.f32.mrf.mxu0
        %v682 = vadd.f32 %v582, %v681
        %683 = vmatprep.mubr.f32.mxu0 0.0
        %v684 = vand.u32 %v280, 4294901760
        %v685 = vsub.f32 %v280, %v684
        %v686 = vand.u32 %v685, 4294901760
        %687 = vmatmul.mubr.f32.gmra.mxu0 %v686
        %v688 = vpop.f32.mrf.mxu0
        %v689 = vadd.f32 %v588, %v688
        %v690 = vpop.f32.mrf.mxu0
        %v691 = vadd.f32 %v590, %v690
        %692 = vmatprep.mubr.f32.mxu0 0.0
        %v693 = vand.u32 %v283, 4294901760
        %v694 = vsub.f32 %v283, %v693
        %v695 = vand.u32 %v694, 4294901760
        %696 = vmatmul.mubr.f32.gmra.mxu0 %v695
        %v697 = vpop.f32.mrf.mxu0
        %v698 = vadd.f32 %v596, %v697
        %v699 = vpop.f32.mrf.mxu0
        %v700 = vadd.f32 %v598, %v699
        %701 = vmatprep.mubr.f32.mxu0 0.0
        %v702 = vand.u32 %v286, 4294901760
        %v703 = vsub.f32 %v286, %v702
        %v704 = vand.u32 %v703, 4294901760
        %705 = vmatmul.mubr.f32.gmra.mxu0 %v704
        %v706 = vpop.f32.mrf.mxu0
        %v707 = vadd.f32 %v604, %v706
        %v708 = vpop.f32.mrf.mxu0
        %v709 = vadd.f32 %v606, %v708
        %710 = vdwg.mxu0
        %711 = vmatprep.subr.mxu0 0.0
        %712 = vmatpush1.msra.mxu0 0.0
        %713 = vmatprep.subr.mxu0 0.0
        %714 = vmatpush1.msra.mxu0 0.0
        %715 = vmatprep.subr.mxu0 0.0
        %716 = vmatpush1.msra.mxu0 0.0
        %717 = vmatprep.subr.mxu0 0.0
        %718 = vmatpush1.msra.mxu0 0.0
        %719 = vmatprep.subr.mxu0 0.0
        %720 = vmatpush1.msra.mxu0 0.0
        %721 = vmatprep.subr.mxu0 0.0
        %722 = vmatpush1.msra.mxu0 0.0
        %723 = vmatprep.subr.mxu0 0.0
        %724 = vmatpush1.msra.mxu0 0.0
        %725 = vmatprep.subr.mxu0 0.0
        %726 = vmatpush1.msra.mxu0 0.0
        %727 = vmatprep.subr.mxu0 0.0
        %728 = vmatpush1.msra.mxu0 0.0
        %729 = vmatprep.subr.mxu0 0.0
        %730 = vmatpush1.msra.mxu0 0.0
        %731 = vmatprep.subr.mxu0 0.0
        %732 = vmatpush1.msra.mxu0 0.0
        %733 = vmatprep.subr.mxu0 0.0
        %734 = vmatpush1.msra.mxu0 0.0
        %735 = vmatprep.subr.mxu0 0.0
        %736 = vmatpush1.msra.mxu0 0.0
        %737 = vmatprep.subr.mxu0 0.0
        %738 = vmatpush1.msra.mxu0 0.0
        %739 = vmatprep.subr.mxu0 0.0
        %740 = vmatpush1.msra.mxu0 0.0
        %v741 = vand.u32 %v291, 4294901760
        %v742 = vsub.f32 %v291, %v741
        %v743 = vand.u32 %v742, 4294901760
        %744 = vmatprep.subr.mxu0 %v743
        %v745 = vand.u32 %v289, 4294901760
        %v746 = vsub.f32 %v289, %v745
        %v747 = vand.u32 %v746, 4294901760
        %748 = vmatpush1.msra.mxu0 %v747
        %749 = vmatprep.subr.mxu0 0.0
        %750 = vmatpush2.msra.mxu0 0.0
        %751 = vmatprep.subr.mxu0 0.0
        %752 = vmatpush2.msra.mxu0 0.0
        %753 = vmatprep.subr.mxu0 0.0
        %754 = vmatpush2.msra.mxu0 0.0
        %755 = vmatprep.subr.mxu0 0.0
        %756 = vmatpush2.msra.mxu0 0.0
        %757 = vmatprep.subr.mxu0 0.0
        %758 = vmatpush2.msra.mxu0 0.0
        %759 = vmatprep.subr.mxu0 0.0
        %760 = vmatpush2.msra.mxu0 0.0
        %761 = vmatprep.subr.mxu0 0.0
        %762 = vmatpush2.msra.mxu0 0.0
        %763 = vmatprep.subr.mxu0 0.0
        %764 = vmatpush2.msra.mxu0 0.0
        %765 = vmatprep.subr.mxu0 0.0
        %766 = vmatpush2.msra.mxu0 0.0
        %767 = vmatprep.subr.mxu0 0.0
        %768 = vmatpush2.msra.mxu0 0.0
        %769 = vmatprep.subr.mxu0 0.0
        %770 = vmatpush2.msra.mxu0 0.0
        %771 = vmatprep.subr.mxu0 0.0
        %772 = vmatpush2.msra.mxu0 0.0
        %773 = vmatprep.subr.mxu0 0.0
        %774 = vmatpush2.msra.mxu0 0.0
        %775 = vmatprep.subr.mxu0 0.0
        %776 = vmatpush2.msra.mxu0 0.0
        %777 = vmatprep.subr.mxu0 0.0
        %778 = vmatpush2.msra.mxu0 0.0
        %779 = vmatprep.subr.mxu0 0.0
        %780 = vmatpush2.msra.mxu0 0.0
        %781 = vmatprep.mubr.f32.mxu0 0.0
        %v782 = vand.u32 %v277, 4294901760
        %783 = vmatmul.mubr.f32.gmra.mxu0 %v782
        %v784 = vpop.f32.mrf.mxu0
        %v785 = vadd.f32 %v680, %v784
        %v786 = vpop.f32.mrf.mxu0
        %v787 = vadd.f32 %v682, %v786
        %788 = vmatprep.mubr.f32.mxu0 0.0
        %v789 = vand.u32 %v280, 4294901760
        %790 = vmatmul.mubr.f32.gmra.mxu0 %v789
        %v791 = vpop.f32.mrf.mxu0
        %v792 = vadd.f32 %v689, %v791
        %v793 = vpop.f32.mrf.mxu0
        %v794 = vadd.f32 %v691, %v793
        %795 = vmatprep.mubr.f32.mxu0 0.0
        %v796 = vand.u32 %v283, 4294901760
        %797 = vmatmul.mubr.f32.gmra.mxu0 %v796
        %v798 = vpop.f32.mrf.mxu0
        %v799 = vadd.f32 %v698, %v798
        %v800 = vpop.f32.mrf.mxu0
        %v801 = vadd.f32 %v700, %v800
        %802 = vmatprep.mubr.f32.mxu0 0.0
        %v803 = vand.u32 %v286, 4294901760
        %804 = vmatmul.mubr.f32.gmra.mxu0 %v803
        %v805 = vpop.f32.mrf.mxu0
        %v806 = vadd.f32 %v707, %v805
        %v807 = vpop.f32.mrf.mxu0
        %v808 = vadd.f32 %v709, %v807
        %809 = vdwg.mxu0
        %810 = vmatprep.subr.mxu0 0.0
        %811 = vmatpush1.msra.mxu0 0.0
        %812 = vmatprep.subr.mxu0 0.0
        %813 = vmatpush1.msra.mxu0 0.0
        %814 = vmatprep.subr.mxu0 0.0
        %815 = vmatpush1.msra.mxu0 0.0
        %816 = vmatprep.subr.mxu0 0.0
        %817 = vmatpush1.msra.mxu0 0.0
        %818 = vmatprep.subr.mxu0 0.0
        %819 = vmatpush1.msra.mxu0 0.0
        %820 = vmatprep.subr.mxu0 0.0
        %821 = vmatpush1.msra.mxu0 0.0
        %822 = vmatprep.subr.mxu0 0.0
        %823 = vmatpush1.msra.mxu0 0.0
        %824 = vmatprep.subr.mxu0 0.0
        %825 = vmatpush1.msra.mxu0 0.0
        %826 = vmatprep.subr.mxu0 0.0
        %827 = vmatpush1.msra.mxu0 0.0
        %828 = vmatprep.subr.mxu0 0.0
        %829 = vmatpush1.msra.mxu0 0.0
        %830 = vmatprep.subr.mxu0 0.0
        %831 = vmatpush1.msra.mxu0 0.0
        %832 = vmatprep.subr.mxu0 0.0
        %833 = vmatpush1.msra.mxu0 0.0
        %834 = vmatprep.subr.mxu0 0.0
        %835 = vmatpush1.msra.mxu0 0.0
        %836 = vmatprep.subr.mxu0 0.0
        %837 = vmatpush1.msra.mxu0 0.0
        %838 = vmatprep.subr.mxu0 0.0
        %839 = vmatpush1.msra.mxu0 0.0
        %v840 = vand.u32 %v291, 4294901760
        %841 = vmatprep.subr.mxu0 %v840
        %v842 = vand.u32 %v289, 4294901760
        %843 = vmatpush1.msra.mxu0 %v842
        %844 = vmatprep.subr.mxu0 0.0
        %845 = vmatpush2.msra.mxu0 0.0
        %846 = vmatprep.subr.mxu0 0.0
        %847 = vmatpush2.msra.mxu0 0.0
        %848 = vmatprep.subr.mxu0 0.0
        %849 = vmatpush2.msra.mxu0 0.0
        %850 = vmatprep.subr.mxu0 0.0
        %851 = vmatpush2.msra.mxu0 0.0
        %852 = vmatprep.subr.mxu0 0.0
        %853 = vmatpush2.msra.mxu0 0.0
        %854 = vmatprep.subr.mxu0 0.0
        %855 = vmatpush2.msra.mxu0 0.0
        %856 = vmatprep.subr.mxu0 0.0
        %857 = vmatpush2.msra.mxu0 0.0
        %858 = vmatprep.subr.mxu0 0.0
        %859 = vmatpush2.msra.mxu0 0.0
        %860 = vmatprep.subr.mxu0 0.0
        %861 = vmatpush2.msra.mxu0 0.0
        %862 = vmatprep.subr.mxu0 0.0
        %863 = vmatpush2.msra.mxu0 0.0
        %864 = vmatprep.subr.mxu0 0.0
        %865 = vmatpush2.msra.mxu0 0.0
        %866 = vmatprep.subr.mxu0 0.0
        %867 = vmatpush2.msra.mxu0 0.0
        %868 = vmatprep.subr.mxu0 0.0
        %869 = vmatpush2.msra.mxu0 0.0
        %870 = vmatprep.subr.mxu0 0.0
        %871 = vmatpush2.msra.mxu0 0.0
        %872 = vmatprep.subr.mxu0 0.0
        %873 = vmatpush2.msra.mxu0 0.0
        %874 = vmatprep.subr.mxu0 0.0
        %875 = vmatpush2.msra.mxu0 0.0
        %876 = vmatprep.mubr.f32.mxu0 0.0
        %v877 = vand.u32 %v277, 4294901760
        %878 = vmatmul.mubr.f32.gmra.mxu0 %v877
        %v879 = vpop.f32.mrf.mxu0
        %v880 = vadd.f32 %v785, %v879
        %v881 = vpop.f32.mrf.mxu0
        %v882 = vadd.f32 %v787, %v881
        %883 = vmatprep.mubr.f32.mxu0 0.0
        %v884 = vand.u32 %v280, 4294901760
        %885 = vmatmul.mubr.f32.gmra.mxu0 %v884
        %v886 = vpop.f32.mrf.mxu0
        %v887 = vadd.f32 %v792, %v886
        %v888 = vpop.f32.mrf.mxu0
        %v889 = vadd.f32 %v794, %v888
        %890 = vmatprep.mubr.f32.mxu0 0.0
        %v891 = vand.u32 %v283, 4294901760
        %892 = vmatmul.mubr.f32.gmra.mxu0 %v891
        %v893 = vpop.f32.mrf.mxu0
        %v894 = vadd.f32 %v799, %v893
        %v895 = vpop.f32.mrf.mxu0
        %v896 = vadd.f32 %v801, %v895
        %897 = vmatprep.mubr.f32.mxu0 0.0
        %v898 = vand.u32 %v286, 4294901760
        %899 = vmatmul.mubr.f32.gmra.mxu0 %v898
        %v900 = vpop.f32.mrf.mxu0
        %v901 = vadd.f32 %v806, %v900
        %v902 = vpop.f32.mrf.mxu0
        %v903 = vadd.f32 %v808, %v902
        %904 = vdwg.mxu0
        %905 = vadd.xlane.f32.xlu0 %v238
        %v906 = vpop.xlane.xlu0 %905
        %907 = vadd.xlane.f32.xlu0 %v239
        %v908 = vpop.xlane.xlu0 %907
        %909 = vadd.xlane.f32.xlu0 %v240
        %v910 = vpop.xlane.xlu0 %909
        %911 = vadd.xlane.f32.xlu0 %v241
        %v912 = vpop.xlane.xlu0 %911
        %v913 = vrcp.pop 128.0
        %v914 = vmul.f32 %v906, %v913
        %v915 = vmul.f32 %v908, %v913
        %v916 = vmul.f32 %v910, %v913
        %v917 = vmul.f32 %v912, %v913
        %v918 = vsub.f32 %v238, %v914
        %v919 = vsub.f32 %v239, %v915
        %v920 = vsub.f32 %v240, %v916
        %v921 = vsub.f32 %v241, %v917
        %v922 = vmul.f32 %v918, %v918
        %v923 = vmul.f32 %v919, %v919
        %v924 = vmul.f32 %v920, %v920
        %v925 = vmul.f32 %v921, %v921
        %926 = vadd.xlane.f32.xlu0 %v922
        %v927 = vpop.xlane.xlu0 %926
        %928 = vadd.xlane.f32.xlu0 %v923
        %v929 = vpop.xlane.xlu0 %928
        %930 = vadd.xlane.f32.xlu0 %v924
        %v931 = vpop.xlane.xlu0 %930
        %932 = vadd.xlane.f32.xlu0 %v925
        %v933 = vpop.xlane.xlu0 %932
        %v934 = vmul.f32 %v927, %v913
        %v935 = vmul.f32 %v929, %v913
        %v936 = vmul.f32 %v931, %v913
        %v937 = vmul.f32 %v933, %v913
        %v938 = vadd.f32 %v934, 1e-05
        %v939 = vadd.f32 %v935, 1e-05
        %v940 = vadd.f32 %v936, 1e-05
        %v941 = vadd.f32 %v937, 1e-05
        %v942 = vrsqrt.pop %v938
        %v943 = vrsqrt.pop %v939
        %v944 = vrsqrt.pop %v940
        %v945 = vrsqrt.pop %v941
        %v946 = vmul.f32 %v918, %v942
        %v947 = vmul.f32 %v919, %v943
        %v948 = vmul.f32 %v920, %v944
        %v949 = vmul.f32 %v921, %v945
        %v950 = vmul.f32 %v946, %v880
        %v951 = vmul.f32 %v947, %v887
        %v952 = vmul.f32 %v948, %v894
        %v953 = vmul.f32 %v949, %v901
        %v954 = vadd.f32 %v882, %v950
        %v955 = vadd.f32 %v889, %v951
        %v956 = vadd.f32 %v896, %v952
        %v957 = vadd.f32 %v903, %v953
        %958 = vst [vmem:[%s204] sm:$0xff] %v954
        %959 = vst [vmem:[%s204 + $0x8] sm:$0xff] %v955
        %960 = vst [vmem:[%s204 + $0x10] sm:$0xff] %v956
        %961 = vst [vmem:[%s204 + $0x18] sm:$0xff] %v957
        %s962 = sand.u32 %s98, 1
        %s963 = scalar_lea.sflag [#allocation3], %s962
        %s964 = sand.u32 %s98, 1
        %s965 = smul.addr %s964, 32
        %s966 = scalar_lea.vmem [#allocation2], %s965
        // Predicated region
        $region33: #{adaptive_layer_norm.1} parent=31 // pred_check
          %p967 = pneg %p108
        $region34: #{adaptive_layer_norm.1} parent=31 // pred_check_branch
          %969 = sbr.rel (%p967) target = $region36
        $region35: #{adaptive_layer_norm.1} parent=31 // pred_region
          %s970 = smul.u32 4, %s17
          %s971 = ssub.s32 25, %s970
          %p972 = scmp.lt.s32.totalorder %s971, 4
          %s973 = scalar_select %p972, %s971, 4
          %s974 = smul.u32 128, %s973
          %s976 = ssub.s32 512, %s974
          %977 = vsyncadd %s963, %s976
          %p978 = scmp.ne.s32.totalorder 0, %s974
          %s979 = smul.addr %s970, 128
          %s980 = scalar_lea.hbm %s3, %s979
          %s981 = smul.u32 8, %s973
          %s982 = sshll.u32 %s966, 4
          %s983 = int_to_ptr.vmem [resolvable:$true] %s982
          %s984 = sshll.u32 %s981, 4
          %988 = dma.vmem_to_hbm [thread:$0]  (%p978), %s983, %s984, %s980, %s963, 128, 128, 8
        $region36: #{adaptive_layer_norm.1} parent=31 // pred_fallthru
          _
      $region32: #{adaptive_layer_norm.1} parent=5 // pred_fallthru
        _
      %p989 = scmp.le.s32.totalorder 2, %s12
      // Predicated region
      $region37: #{adaptive_layer_norm.1} parent=5 // pred_check
        %p990 = pneg %p989
      $region38: #{adaptive_layer_norm.1} parent=5 // pred_check_branch
        %992 = sbr.rel (%p990) target = $region40
      $region39: #{adaptive_layer_norm.1} parent=5 // pred_region
        %s993 = ssub.s32 %s12, 2
        // Predicated region
        $region41: #{adaptive_layer_norm.1} parent=39 // pred_check
          %p994 = pneg %p114
        $region42: #{adaptive_layer_norm.1} parent=39 // pred_check_branch
          %996 = sbr.rel (%p994) target = $region44
        $region43: #{adaptive_layer_norm.1} parent=39 // pred_region
          %s997 = sand.u32 %s99, 1
          %s998 = scalar_lea.sflag [#allocation3], %s997
          %s999 = sand.u32 %s99, 1
          %s1000 = smul.addr %s999, 32
          %s1001 = scalar_lea.vmem [#allocation2], %s1000
          %1002 = dma.done %s998, 512
        $region44: #{adaptive_layer_norm.1} parent=39 // pred_fallthru
          _
      $region40: #{adaptive_layer_norm.1} parent=5 // pred_fallthru
        _
    $region6: #{adaptive_layer_norm.1} parent=1 // loop_footer
      %s16 = sadd.s32 1, %s12
    $region7: #{adaptive_layer_norm.1} parent=1 // loop_footer_branch
      %11 = sbr.rel target = $region3
    $region8: #{adaptive_layer_norm.1} parent=1 // loop_exit
      _
    %1003 = vsyncpa [#allocation3], 1
    %s1004 = scalar_lea.sflag [#allocation3], 1
    %1005 = vsyncpa %s1004, 1

</llo_original>
